<compile_context>
chip_gen: v5e
topology: v5e:2x2
jax: 0.10.0
libtpu: 0.0.40
codegen_flags: <defaults>
</compile_context>

<pallas_src>
import functools

import jax
import jax.numpy as jnp
from jax.experimental import pallas as pl
from jax.experimental.pallas import tpu as pltpu


def _cdiv(a, b):
    return -(-a // b)


def _round_up(x, m):
    return _cdiv(x, m) * m


def _decoder_kernel(z_ref, l_ref, w12t_ref, b12_ref, rho_ref, logitpi_ref, *,
                    gp: int, approx_recip: bool):
    """One batch tile: fused (s1|s2) matmul, softmax over genes, exp(l) scaling."""
    z = z_ref[...]                                                     # (TB, L) f32

    # Single fused MXU pass for both linear layers (weights concatenated on lanes).
    # gp is a multiple of 128 so the split below is lane-aligned (no relayout).
    s = jnp.dot(z, w12t_ref[...], preferred_element_type=jnp.float32)  # (TB, 2*Gp)
    s = s + b12_ref[...]                                               # (1, 2*Gp) bcast

    # Store logitpi immediately: ends the live range of the second half of s before
    # the softmax intermediates are created and lets its writeback DMA start earlier.
    logitpi_ref[...] = s[:, gp:]

    # Numerically-stable softmax over the gene (lane) axis. Padded gene columns carry
    # a -1e30 bias, so they contribute exactly 0 to the denominator and to rho.
    s1 = s[:, :gp]
    m = jnp.max(s1, axis=-1, keepdims=True)
    e = jnp.exp(s1 - m)
    denom = jnp.sum(e, axis=-1, keepdims=True)

    # Fold exp(l) into the normalization: one (TB,1) multiply instead of a second
    # full (TB,Gp) multiply. The approx reciprocal runs on the otherwise-idle EUP
    # (~1e-3 relative accuracy); pass approx_reciprocal=False for exact division.
    expl = jnp.exp(l_ref[...])                                         # (TB, 1)
    if approx_recip:
        scale = expl * pl.reciprocal(denom, approx=True)
    else:
        scale = expl / denom
    rho_ref[...] = e * scale


def _vmem_capacity_bytes():
    """Per-TensorCore VMEM capacity (v7x: 64 MiB/TC, v5e/v6e: 128 MiB)."""
    try:
        kind = jax.devices()[0].device_kind.lower()
    except Exception:
        kind = ""
    # Unknown chip -> conservative 64 MiB (also the correct per-TC figure on v7x,
    # even if the runtime reports the 2-TC per-chip total).
    cap = (64 << 20) if ("v7" in kind or not kind) else (128 << 20)
    try:
        info = pltpu.get_tpu_info()
        reported = int(getattr(info, "vmem_capacity_bytes", 0) or 0)
        if reported:
            cap = min(cap, reported)
    except Exception:
        pass
    return cap


def _choose_tile_b(B, L, Gp, vmem_cap):
    """Pick (TB, Bp): multiple-of-8 batch tile sized for per-TC VMEM and ~4 MB of
    output traffic per grid step, with minimal batch padding and >=2 grid steps when
    the batch allows (keeps both v7x TensorCores busy)."""
    budget = int(vmem_cap * 0.5)                  # headroom for regalloc / compiler
    resident = (L * 2 * Gp + 2 * Gp) * 4          # single-buffered weights + biases
    # Per batch-row bytes: z + l inputs (double-buffered), rho + logitpi outputs
    # (double-buffered), plus ~5 Gp-wide f32 intermediates (s is 2*Gp wide, e, s1-m,
    # and store staging).
    per_row = 2 * (L + 1) * 4 + 2 * 2 * Gp * 4 + 5 * Gp * 4
    tb_vmem = (budget - resident) // max(per_row, 1)
    tb_vmem = max(8, (tb_vmem // 8) * 8)

    # Per-step-bytes target: ~4 MB of output traffic per grid step amortizes the
    # fixed ~0.35 us step overhead; beyond that, bigger tiles only add padding waste.
    tb_bytes = max(8, _round_up(_cdiv(4 << 20, 2 * Gp * 4), 8))
    tb_max = max(8, min(tb_vmem, tb_bytes))

    n_steps = _cdiv(B, tb_max)
    if n_steps == 1 and B >= 16:
        n_steps = 2                               # >=2 parallel steps for v7x megacore
    tb = _round_up(_cdiv(B, n_steps), 8)          # minimizes padded (wasted) rows
    bp = _round_up(B, tb)
    return tb, bp


def prepare_decoder_params(W1, b1, W2, b2):
    """One-time parameter prep (kept out of the per-call hot path).

    Returns ([W1^T | W2^T] padded to (L, 2*Gp), [b1 | b2] padded to (1, 2*Gp), G)
    with Gp = round_up(G, 128). Padded gene columns of W are zero and their b1 bias
    is -1e30, so they softmax to exactly 0 and never perturb the real genes.
    """
    G, L = W1.shape
    Gp = _round_up(G, 128)
    pad = Gp - G
    w1t = jnp.asarray(W1, jnp.float32).T                  # (L, G)
    w2t = jnp.asarray(W2, jnp.float32).T
    b1f = jnp.asarray(b1, jnp.float32)
    b2f = jnp.asarray(b2, jnp.float32)
    if pad:
        w1t = jnp.pad(w1t, ((0, 0), (0, pad)))
        w2t = jnp.pad(w2t, ((0, 0), (0, pad)))
        b1f = jnp.pad(b1f, (0, pad), constant_values=-1e30)
        b2f = jnp.pad(b2f, (0, pad))
    w12t = jnp.concatenate([w1t, w2t], axis=1)            # (L, 2*Gp)
    b12 = jnp.concatenate([b1f, b2f]).reshape(1, -1)      # (1, 2*Gp)
    return w12t, b12, G


def decoder_forward_prepared(z, l, w12t, b12, logtheta, n_input,
                             act_nn_exp=True, approx_reciprocal=True):
    """z: (B, n_latent); l: (B,); w12t: (n_latent, 2*Gp); b12: (1, 2*Gp)."""
    B, L = z.shape
    Gp = w12t.shape[1] // 2
    G = int(n_input)

    # theta depends only on the (G,) parameter -> compute once in plain JAX rather
    # than redundantly per grid step inside the kernel.
    logtheta = jnp.asarray(logtheta, jnp.float32)
    theta = jnp.exp(logtheta) if act_nn_exp else jax.nn.softplus(logtheta)

    vmem_cap = _vmem_capacity_bytes()
    TB, Bp = _choose_tile_b(B, L, Gp, vmem_cap)

    # Pad the batch to a multiple of TB; padded rows are sliced off afterwards.
    z32 = jnp.asarray(z, jnp.float32)
    l2 = jnp.asarray(l, jnp.float32).reshape(B, 1)
    if Bp != B:
        z32 = jnp.pad(z32, ((0, Bp - B), (0, 0)))
        l2 = jnp.pad(l2, ((0, Bp - B), (0, 0)))

    kernel = functools.partial(_decoder_kernel, gp=Gp,
                               approx_recip=bool(approx_reciprocal))

    def _run(single_buffer_weights):
        wkw = {"pipeline_mode": pl.Buffered(1)} if single_buffer_weights else {}
        return pl.pallas_call(
            kernel,
            out_shape=(
                jax.ShapeDtypeStruct((Bp, Gp), jnp.float32),   # rho (padded)
                jax.ShapeDtypeStruct((Bp, Gp), jnp.float32),   # logitpi (padded)
            ),
            grid=(Bp // TB,),
            in_specs=[
                pl.BlockSpec((TB, L), lambda i: (i, 0)),              # z (streamed)
                pl.BlockSpec((TB, 1), lambda i: (i, 0)),              # l
                pl.BlockSpec((L, 2 * Gp), lambda i: (0, 0), **wkw),   # [W1^T | W2^T]
                pl.BlockSpec((1, 2 * Gp), lambda i: (0, 0), **wkw),   # [b1 | b2]
            ],
            out_specs=(
                pl.BlockSpec((TB, Gp), lambda i: (i, 0)),
                pl.BlockSpec((TB, Gp), lambda i: (i, 0)),
            ),
            compiler_params=pltpu.CompilerParams(
                dimension_semantics=("parallel",),
                vmem_limit_bytes=int(vmem_cap * 0.85),
            ),
        )(z32, l2, w12t, b12)

    try:
        rho, logitpi = _run(True)   # weights/biases single-buffered (saves VMEM)
    except Exception:
        # Fallback in case pl.Buffered(1) is rejected by this jax/Mosaic version.
        rho, logitpi = _run(False)

    if Bp != B or Gp != G:
        rho = rho[:B, :G]
        logitpi = logitpi[:B, :G]
    return theta, rho, logitpi


def decoder_forward(z, l, W1, b1, W2, b2, logtheta, act_nn_exp=True,
                    approx_reciprocal=True):
    """Convenience wrapper matching the PyTorch parameter layout."""
    w12t, b12, G = prepare_decoder_params(W1, b1, W2, b2)
    return decoder_forward_prepared(z, l, w12t, b12, logtheta, G,
                                    act_nn_exp=act_nn_exp,
                                    approx_reciprocal=approx_reciprocal)


def _reference(z, l, W1, b1, W2, b2, logtheta, act_nn_exp=True):
    s1 = z @ W1.T + b1
    scale_rho = jax.nn.softmax(s1, axis=1)
    rho = jnp.exp(l).reshape(-1, 1) * scale_rho
    logitpi = z @ W2.T + b2
    theta = jnp.exp(logtheta) if act_nn_exp else jax.nn.softplus(logtheta)
    return theta, rho, logitpi


if __name__ == "__main__":
    # Small shapes consistent with the module: n_input = genes, n_latent = latent dim.
    # n_input=200 is deliberately NOT a multiple of 128 to exercise the lane-padding.
    B, n_latent, n_input = 8, 32, 200
    key = jax.random.PRNGKey(0)
    k = jax.random.split(key, 7)

    z = jax.random.normal(k[0], (B, n_latent), dtype=jnp.float32)
    l = jax.random.normal(k[1], (B,), dtype=jnp.float32) * 0.1

    # Deterministic parameter init mirroring the module's __init__.
    logtheta = jax.random.normal(k[2], (n_input,), dtype=jnp.float32)
    W1 = 0.01 * jax.random.normal(k[3], (n_input, n_latent), dtype=jnp.float32)
    b1 = 0.01 * jax.random.normal(k[4], (n_input,), dtype=jnp.float32)
    W2 = 0.01 * jax.random.normal(k[5], (n_input, n_latent), dtype=jnp.float32)
    b2 = 0.01 * jax.random.normal(k[6], (n_input,), dtype=jnp.float32)

    # One-time parameter prep (transpose + concat + lane padding), out of the hot path.
    w12t, b12, G = prepare_decoder_params(W1, b1, W2, b2)

    theta, rho, logitpi = decoder_forward_prepared(z, l, w12t, b12, logtheta, G,
                                                   act_nn_exp=True)
    jax.block_until_ready((theta, rho, logitpi))

    t_ref, r_ref, p_ref = _reference(z, l, W1, b1, W2, b2, logtheta, act_nn_exp=True)
    assert theta.shape == (n_input,)
    assert rho.shape == (B, n_input) and logitpi.shape == (B, n_input)
    assert jnp.allclose(theta, t_ref, atol=1e-5, rtol=1e-5)
    # rho uses the EUP approx reciprocal -> allow a slightly looser tolerance.
    assert jnp.allclose(rho, r_ref, atol=1e-4, rtol=1e-3)
    assert jnp.allclose(logitpi, p_ref, atol=1e-5, rtol=1e-5)

    print("KERNEL_OK")
</pallas_src>

<mosaic_0001>
module attributes {stable_mosaic.version = 11 : i64} {
  func.func @_decoder_kernel(%arg0: i32, %arg1: memref<8x32xf32, #tpu.memory_space<vmem>>, %arg2: memref<8x1xf32, #tpu.memory_space<vmem>>, %arg3: memref<32x512xf32, #tpu.memory_space<vmem>>, %arg4: memref<1x512xf32, #tpu.memory_space<vmem>>, %arg5: memref<8x256xf32, #tpu.memory_space<vmem>>, %arg6: memref<8x256xf32, #tpu.memory_space<vmem>>) attributes {dimension_semantics = [#tpu.dimension_semantics<parallel>], iteration_bounds = array<i64: 1>, scalar_prefetch = 0 : i64, scratch_operands = 0 : i64, tpu.core_type = #tpu.core_type<tc>, window_params = [{transform_indices = @transform_0, window_bounds = array<i64: 8, 32>}, {transform_indices = @transform_1, window_bounds = array<i64: 8, 1>}, {pipeline_mode = #tpu.pipeline_mode<synchronous>, transform_indices = @transform_2, window_bounds = array<i64: 32, 512>}, {pipeline_mode = #tpu.pipeline_mode<synchronous>, transform_indices = @transform_3, window_bounds = array<i64: 1, 512>}, {transform_indices = @transform_4, window_bounds = array<i64: 8, 256>}, {transform_indices = @transform_5, window_bounds = array<i64: 8, 256>}]} {
    %c0 = arith.constant 0 : index
    %c0_0 = arith.constant 0 : index
    %0 = vector.load %arg1[%c0, %c0_0] : memref<8x32xf32, #tpu.memory_space<vmem>>, vector<8x32xf32>
    %c0_1 = arith.constant 0 : index
    %c0_2 = arith.constant 0 : index
    %1 = vector.load %arg3[%c0_1, %c0_2] : memref<32x512xf32, #tpu.memory_space<vmem>>, vector<32x512xf32>
    %cst = arith.constant dense<0.000000e+00> : vector<8x512xf32>
    %2 = tpu.matmul %0, %1, %cst {dimension_numbers = #tpu.dot_dimension_numbers<[1], [0], [0], [1], [0, 0, 1, 1], [], []>} : vector<8x32xf32>, vector<32x512xf32>, vector<8x512xf32> -> vector<8x512xf32>
    %c0_3 = arith.constant 0 : index
    %c0_4 = arith.constant 0 : index
    %3 = vector.load %arg4[%c0_3, %c0_4] : memref<1x512xf32, #tpu.memory_space<vmem>>, vector<1x512xf32>
    %4 = vector.broadcast %3 : vector<1x512xf32> to vector<8x512xf32>
    %5 = arith.addf %2, %4 : vector<8x512xf32>
    %6 = vector.extract_strided_slice %5 {offsets = [0, 256], sizes = [8, 256], strides = [1, 1]} : vector<8x512xf32> to vector<8x256xf32>
    %c0_5 = arith.constant 0 : index
    %c0_6 = arith.constant 0 : index
    %7 = vector.load %arg6[%c0_5, %c0_6] : memref<8x256xf32, #tpu.memory_space<vmem>>, vector<8x256xf32>
    tpu.vector_store %arg6[%c0_5, %c0_6], %6 {strides = array<i32>} : memref<8x256xf32, #tpu.memory_space<vmem>>, vector<8x256xf32>,
    %8 = vector.extract_strided_slice %5 {offsets = [0, 0], sizes = [8, 256], strides = [1, 1]} : vector<8x512xf32> to vector<8x256xf32>
    %cst_7 = arith.constant dense<0xFF800000> : vector<8xf32>
    %9 = vector.multi_reduction <maximumf>, %8, %cst_7 [1] : vector<8x256xf32> to vector<8xf32>
    %10 = vector.shape_cast %9 : vector<8xf32> to vector<8x1xf32>
    %11 = vector.broadcast %10 : vector<8x1xf32> to vector<8x256xf32>
    %12 = arith.subf %8, %11 : vector<8x256xf32>
    %13 = math.exp %12 : vector<8x256xf32>
    %cst_8 = arith.constant dense<0.000000e+00> : vector<8xf32>
    %14 = vector.multi_reduction <add>, %13, %cst_8 [1] : vector<8x256xf32> to vector<8xf32>
    %15 = vector.shape_cast %14 : vector<8xf32> to vector<8x1xf32>
    %c0_9 = arith.constant 0 : index
    %c0_10 = arith.constant 0 : index
    %16 = vector.load %arg2[%c0_9, %c0_10] : memref<8x1xf32, #tpu.memory_space<vmem>>, vector<8x1xf32>
    %17 = math.exp %16 : vector<8x1xf32>
    %18 = tpu.reciprocal %15 {approx = true} : vector<8x1xf32> -> vector<8x1xf32>
    %19 = arith.mulf %17, %18 : vector<8x1xf32>
    %20 = vector.broadcast %19 : vector<8x1xf32> to vector<8x256xf32>
    %21 = arith.mulf %13, %20 : vector<8x256xf32>
    %c0_11 = arith.constant 0 : index
    %c0_12 = arith.constant 0 : index
    %22 = vector.load %arg5[%c0_11, %c0_12] : memref<8x256xf32, #tpu.memory_space<vmem>>, vector<8x256xf32>
    tpu.vector_store %arg5[%c0_11, %c0_12], %21 {strides = array<i32>} : memref<8x256xf32, #tpu.memory_space<vmem>>, vector<8x256xf32>,
    return
  }
  func.func @transform_0(%arg0: i32) -> (i32, i32) {
    %c0_i32 = arith.constant 0 : i32
    %c0_i32_0 = arith.constant 0 : i32
    return %arg0, %c0_i32 : i32, i32
  }
  func.func @transform_1(%arg0: i32) -> (i32, i32) {
    %c0_i32 = arith.constant 0 : i32
    %c0_i32_0 = arith.constant 0 : i32
    return %arg0, %c0_i32 : i32, i32
  }
  func.func @transform_2(%arg0: i32) -> (i32, i32) {
    %c0_i32 = arith.constant 0 : i32
    %c0_i32_0 = arith.constant 0 : i32
    %c0_i32_1 = arith.constant 0 : i32
    return %c0_i32, %c0_i32_0 : i32, i32
  }
  func.func @transform_3(%arg0: i32) -> (i32, i32) {
    %c0_i32 = arith.constant 0 : i32
    %c0_i32_0 = arith.constant 0 : i32
    %c0_i32_1 = arith.constant 0 : i32
    return %c0_i32, %c0_i32_0 : i32, i32
  }
  func.func @transform_4(%arg0: i32) -> (i32, i32) {
    %c0_i32 = arith.constant 0 : i32
    %c0_i32_0 = arith.constant 0 : i32
    return %arg0, %c0_i32 : i32, i32
  }
  func.func @transform_5(%arg0: i32) -> (i32, i32) {
    %c0_i32 = arith.constant 0 : i32
    %c0_i32_0 = arith.constant 0 : i32
    return %arg0, %c0_i32 : i32, i32
  }
}

module attributes {stable_mosaic.version = 11 : i64} {
  func.func @_decoder_kernel(%arg0: i32, %arg1: memref<8x32xf32, #tpu.memory_space<vmem>>, %arg2: memref<8x1xf32, #tpu.memory_space<vmem>>, %arg3: memref<32x512xf32, #tpu.memory_space<vmem>>, %arg4: memref<1x512xf32, #tpu.memory_space<vmem>>, %arg5: memref<8x256xf32, #tpu.memory_space<vmem>>, %arg6: memref<8x256xf32, #tpu.memory_space<vmem>>) attributes {dimension_semantics = [#tpu.dimension_semantics<parallel>], iteration_bounds = array<i64: 1>, scalar_prefetch = 0 : i64, scratch_operands = 0 : i64, tpu.core_type = #tpu.core_type<tc>, window_params = [{transform_indices = @transform_0, window_bounds = array<i64: 8, 32>}, {transform_indices = @transform_1, window_bounds = array<i64: 8, 1>}, {pipeline_mode = #tpu.pipeline_mode<synchronous>, transform_indices = @transform_2, window_bounds = array<i64: 32, 512>}, {pipeline_mode = #tpu.pipeline_mode<synchronous>, transform_indices = @transform_3, window_bounds = array<i64: 1, 512>}, {transform_indices = @transform_4, window_bounds = array<i64: 8, 256>}, {transform_indices = @transform_5, window_bounds = array<i64: 8, 256>}]} {
    %c0 = arith.constant 0 : index
    %c0_0 = arith.constant 0 : index
    %0 = vector.load %arg1[%c0, %c0_0] : memref<8x32xf32, #tpu.memory_space<vmem>>, vector<8x32xf32>
    %c0_1 = arith.constant 0 : index
    %c0_2 = arith.constant 0 : index
    %1 = vector.load %arg3[%c0_1, %c0_2] : memref<32x512xf32, #tpu.memory_space<vmem>>, vector<32x512xf32>
    %cst = arith.constant dense<0.000000e+00> : vector<8x512xf32>
    %2 = tpu.matmul %0, %1, %cst {dimension_numbers = #tpu.dot_dimension_numbers<[1], [0], [0], [1], [0, 0, 1, 1], [], []>} : vector<8x32xf32>, vector<32x512xf32>, vector<8x512xf32> -> vector<8x512xf32>
    %c0_3 = arith.constant 0 : index
    %c0_4 = arith.constant 0 : index
    %3 = vector.load %arg4[%c0_3, %c0_4] : memref<1x512xf32, #tpu.memory_space<vmem>>, vector<1x512xf32>
    %4 = vector.broadcast %3 : vector<1x512xf32> to vector<8x512xf32>
    %5 = arith.addf %2, %4 : vector<8x512xf32>
    %6 = vector.extract_strided_slice %5 {offsets = [0, 256], sizes = [8, 256], strides = [1, 1]} : vector<8x512xf32> to vector<8x256xf32>
    %c0_5 = arith.constant 0 : index
    %c0_6 = arith.constant 0 : index
    %7 = vector.load %arg6[%c0_5, %c0_6] : memref<8x256xf32, #tpu.memory_space<vmem>>, vector<8x256xf32>
    tpu.vector_store %arg6[%c0_5, %c0_6], %6 {strides = array<i32>} : memref<8x256xf32, #tpu.memory_space<vmem>>, vector<8x256xf32>,
    %8 = vector.extract_strided_slice %5 {offsets = [0, 0], sizes = [8, 256], strides = [1, 1]} : vector<8x512xf32> to vector<8x256xf32>
    %cst_7 = arith.constant dense<0xFF800000> : vector<8xf32>
    %9 = vector.multi_reduction <maximumf>, %8, %cst_7 [1] : vector<8x256xf32> to vector<8xf32>
    %10 = vector.shape_cast %9 : vector<8xf32> to vector<8x1xf32>
    %11 = vector.broadcast %10 : vector<8x1xf32> to vector<8x256xf32>
    %12 = arith.subf %8, %11 : vector<8x256xf32>
    %13 = math.exp %12 : vector<8x256xf32>
    %cst_8 = arith.constant dense<0.000000e+00> : vector<8xf32>
    %14 = vector.multi_reduction <add>, %13, %cst_8 [1] : vector<8x256xf32> to vector<8xf32>
    %15 = vector.shape_cast %14 : vector<8xf32> to vector<8x1xf32>
    %c0_9 = arith.constant 0 : index
    %c0_10 = arith.constant 0 : index
    %16 = vector.load %arg2[%c0_9, %c0_10] : memref<8x1xf32, #tpu.memory_space<vmem>>, vector<8x1xf32>
    %17 = math.exp %16 : vector<8x1xf32>
    %18 = tpu.reciprocal %15 {approx = true} : vector<8x1xf32> -> vector<8x1xf32>
    %19 = arith.mulf %17, %18 : vector<8x1xf32>
    %20 = vector.broadcast %19 : vector<8x1xf32> to vector<8x256xf32>
    %21 = arith.mulf %13, %20 : vector<8x256xf32>
    %c0_11 = arith.constant 0 : index
    %c0_12 = arith.constant 0 : index
    %22 = vector.load %arg5[%c0_11, %c0_12] : memref<8x256xf32, #tpu.memory_space<vmem>>, vector<8x256xf32>
    tpu.vector_store %arg5[%c0_11, %c0_12], %21 {strides = array<i32>} : memref<8x256xf32, #tpu.memory_space<vmem>>, vector<8x256xf32>,
    return
  }
  func.func @transform_0(%arg0: i32) -> (i32, i32) {
    %c0_i32 = arith.constant 0 : i32
    %c0_i32_0 = arith.constant 0 : i32
    return %arg0, %c0_i32 : i32, i32
  }
  func.func @transform_1(%arg0: i32) -> (i32, i32) {
    %c0_i32 = arith.constant 0 : i32
    %c0_i32_0 = arith.constant 0 : i32
    return %arg0, %c0_i32 : i32, i32
  }
  func.func @transform_2(%arg0: i32) -> (i32, i32) {
    %c0_i32 = arith.constant 0 : i32
    %c0_i32_0 = arith.constant 0 : i32
    %c0_i32_1 = arith.constant 0 : i32
    return %c0_i32, %c0_i32_0 : i32, i32
  }
  func.func @transform_3(%arg0: i32) -> (i32, i32) {
    %c0_i32 = arith.constant 0 : i32
    %c0_i32_0 = arith.constant 0 : i32
    %c0_i32_1 = arith.constant 0 : i32
    return %c0_i32, %c0_i32_0 : i32, i32
  }
  func.func @transform_4(%arg0: i32) -> (i32, i32) {
    %c0_i32 = arith.constant 0 : i32
    %c0_i32_0 = arith.constant 0 : i32
    return %arg0, %c0_i32 : i32, i32
  }
  func.func @transform_5(%arg0: i32) -> (i32, i32) {
    %c0_i32 = arith.constant 0 : i32
    %c0_i32_0 = arith.constant 0 : i32
    return %arg0, %c0_i32 : i32, i32
  }
}

</mosaic_0001>

<llo_original>
// kernel: tpu_custom_call.1
$region0: #{tpu_custom_call.1}
  #allocation0 [shape = 'u32[]', space=smem, size = 0x4, offset = 0x4, fixed_abs, tag = 'smem constant byte address 0x4 - core index']
  #allocation1 [shape = 'u32[72,128]{1,0:T(1,128)}', space=vmem, size = 0x9000, scoped, tag = 'internal scratch']
  %s0 = inlined_call_operand.vmem [shape: f32[8,32], index: 0, kind: input, shape index: {}]
  %s1 = inlined_call_operand.vmem [shape: f32[8,1], index: 1, kind: input, shape index: {}]
  %s2 = inlined_call_operand.hbm [shape: f32[32,512], index: 2, kind: input, shape index: {}]
  %s3 = inlined_call_operand.hbm [shape: f32[1,512], index: 3, kind: input, shape index: {}]
  %s4 = inlined_call_operand.hbm [shape: f32[8,256], index: 4, kind: output, shape index: {0}]
  %s5 = inlined_call_operand.hbm [shape: f32[8,256], index: 5, kind: output, shape index: {1}]
  %6 = xla_tuple %s4, %s5
  %s7 = sld [smem:[#allocation0]]
  $region42: #{tpu_custom_call.1} parent=0
    _
  %s9 = ssub.s32 1, %s7
  %s10 = scalar_select 0, %s9, %s7
  $region1: #{tpu_custom_call.1} parent=0
    #allocation2 [shape = 'u8[65536]{0}', space=vmem, size = 0x10000, scoped, tag = 'input window, operand 2, single buffered']
    #allocation3 [shape = 's32[1]{0}', space=sflag, size = 0x4, scoped, tag = 'scoped memory for tpu_custom_call.1']
    #allocation4 [shape = 's32[1]{0}', space=sflag, size = 0x4, scoped, tag = 'scoped memory for tpu_custom_call.1']
    #allocation5 [shape = 'u8[2048]{0}', space=vmem, size = 0x800, scoped, tag = 'input window, operand 3, single buffered']
    #allocation6 [shape = 's32[1]{0}', space=sflag, size = 0x4, scoped, tag = 'scoped memory for tpu_custom_call.1']
    #allocation7 [shape = 'u8[8192]{0}', space=vmem, size = 0x2000, scoped, tag = 'output window, operand 0, single buffered']
    #allocation8 [shape = 'u8[8192]{0}', space=vmem, size = 0x2000, scoped, tag = 'output window, operand 1, single buffered']
    #allocation9 [shape = 's32[1]{0}', space=sflag, size = 0x4, scoped, tag = 'scoped memory for tpu_custom_call.1']
    %11 = vsyncpa [#allocation3], 0
    %12 = vsyncpa [#allocation6], 0
    %13 = vsyncpa [#allocation4], 0
    %14 = vsyncpa [#allocation9], 0
    // Predicated region
    $region2: #{tpu_custom_call.1} parent=1 // pred_check
      _
    $region3: #{tpu_custom_call.1} parent=1 // pred_check_branch
      %16 = sbr.rel (0) target = $region5
    $region4: #{tpu_custom_call.1} parent=1 // pred_region
      _
    $region5: #{tpu_custom_call.1} parent=1 // pred_fallthru
      _
    // Predicated region
    $region6: #{tpu_custom_call.1} parent=1 // pred_check
      _
    $region7: #{tpu_custom_call.1} parent=1 // pred_check_branch
      %18 = sbr.rel (0) target = $region9
    $region8: #{tpu_custom_call.1} parent=1 // pred_region
      _
    $region9: #{tpu_custom_call.1} parent=1 // pred_fallthru
      _
    // Predicated region
    $region10: #{tpu_custom_call.1} parent=1 // pred_check
      _
    $region11: #{tpu_custom_call.1} parent=1 // pred_check_branch
      %20 = sbr.rel (0) target = $region13
    $region12: #{tpu_custom_call.1} parent=1 // pred_region
      %22 = vsyncadd [#allocation3], 0
      %s23 = sshll.u32 %s2, 4
      %s24 = int_to_ptr.hbm [resolvable:$true] %s23
      %s25 = sshll.u32 [#allocation2], 4
      %s26 = int_to_ptr.vmem [resolvable:$true] %s25
      %31 = dma.hbm_to_vmem [thread:$0]  %s24, 2048, %s26, [#allocation3], 512, 512, 32
    $region13: #{tpu_custom_call.1} parent=1 // pred_fallthru
      _
    // Predicated region
    $region14: #{tpu_custom_call.1} parent=1 // pred_check
      _
    $region15: #{tpu_custom_call.1} parent=1 // pred_check_branch
      %33 = sbr.rel (0) target = $region17
    $region16: #{tpu_custom_call.1} parent=1 // pred_region
      %35 = vsyncadd [#allocation6], 0
      %s37 = sshll.u32 %s3, 4
      %s38 = int_to_ptr.hbm [resolvable:$true] %s37
      %s39 = sshll.u32 [#allocation5], 4
      %s40 = int_to_ptr.vmem [resolvable:$true] %s39
      %42 = dma.hbm_to_vmem [thread:$0]  %s38, 64, %s40, [#allocation6]
    $region17: #{tpu_custom_call.1} parent=1 // pred_fallthru
      _
    // Predicated region
    $region18: #{tpu_custom_call.1} parent=1 // pred_check
      _
    $region19: #{tpu_custom_call.1} parent=1 // pred_check_branch
      %44 = sbr.rel (0) target = $region21
    $region20: #{tpu_custom_call.1} parent=1 // pred_region
      %46 = dma.done [#allocation3], 2048
    $region21: #{tpu_custom_call.1} parent=1 // pred_fallthru
      _
    // Predicated region
    $region22: #{tpu_custom_call.1} parent=1 // pred_check
      _
    $region23: #{tpu_custom_call.1} parent=1 // pred_check_branch
      %48 = sbr.rel (0) target = $region25
    $region24: #{tpu_custom_call.1} parent=1 // pred_region
      %50 = dma.done [#allocation6], 64
    $region25: #{tpu_custom_call.1} parent=1 // pred_fallthru
      _
    %v51 = vld [vmem:[%s0] sm:$0xff]
    %v52 = vld [vmem:[#allocation2] sm:$0xff]
    %v53 = vld [vmem:[#allocation2 + $0x8] sm:$0xff]
    %v54 = vld [vmem:[#allocation2 + $0x10] sm:$0xff]
    %v55 = vld [vmem:[#allocation2 + $0x18] sm:$0xff]
    %v56 = vld [vmem:[#allocation2 + $0x20] sm:$0xff]
    %v57 = vld [vmem:[#allocation2 + $0x28] sm:$0xff]
    %v58 = vld [vmem:[#allocation2 + $0x30] sm:$0xff]
    %v59 = vld [vmem:[#allocation2 + $0x38] sm:$0xff]
    %v60 = vld [vmem:[#allocation2 + $0x40] sm:$0xff]
    %v61 = vld [vmem:[#allocation2 + $0x48] sm:$0xff]
    %v62 = vld [vmem:[#allocation2 + $0x50] sm:$0xff]
    %v63 = vld [vmem:[#allocation2 + $0x58] sm:$0xff]
    %v64 = vld [vmem:[#allocation2 + $0x60] sm:$0xff]
    %v65 = vld [vmem:[#allocation2 + $0x68] sm:$0xff]
    %v66 = vld [vmem:[#allocation2 + $0x70] sm:$0xff]
    %v67 = vld [vmem:[#allocation2 + $0x78] sm:$0xff]
    %v68 = vld [vmem:[#allocation5] sm:$0xf]
    %v70 = vperm.slane %v68, 0
    %v71 = vperm.slane %v68, 1
    %v72 = vperm.slane %v68, 2
    %v73 = vperm.slane %v68, 3
    %vm78 = vcmask 261120
    %v80 = vsel %vm78, %v51, 0
    %82 = vmatpush.msra.mxu0 0.0
    %83 = vmatpush.msra.mxu0 0.0
    %84 = vmatpush.msra.mxu0 0.0
    %85 = vmatpush.msra.mxu0 0.0
    %86 = vmatpush.msra.mxu0 0.0
    %87 = vmatpush.msra.mxu0 0.0
    %88 = vmatpush.msra.mxu0 0.0
    %89 = vmatpush.msra.mxu0 0.0
    %90 = vmatpush.msra.mxu0 0.0
    %91 = vmatpush.msra.mxu0 0.0
    %92 = vmatpush.msra.mxu0 0.0
    %93 = vmatpush.msra.mxu0 0.0
    %94 = vmatpush.msra.mxu0 %v64
    %95 = vmatpush.msra.mxu0 %v60
    %96 = vmatpush.msra.mxu0 %v56
    %97 = vmatpush.msra.mxu0 %v52
    %98 = vmatmul.f32.gmra.mxu0 %v80
    %v99 = vpop.f32.mrf.mxu0
    %v100 = vadd.f32 %v70, %v99
    %101 = vdwg.mxu0
    %102 = vmatpush.msra.mxu0 0.0
    %103 = vmatpush.msra.mxu0 0.0
    %104 = vmatpush.msra.mxu0 0.0
    %105 = vmatpush.msra.mxu0 0.0
    %106 = vmatpush.msra.mxu0 0.0
    %107 = vmatpush.msra.mxu0 0.0
    %108 = vmatpush.msra.mxu0 0.0
    %109 = vmatpush.msra.mxu0 0.0
    %110 = vmatpush.msra.mxu0 0.0
    %111 = vmatpush.msra.mxu0 0.0
    %112 = vmatpush.msra.mxu0 0.0
    %113 = vmatpush.msra.mxu0 0.0
    %114 = vmatpush.msra.mxu0 %v65
    %115 = vmatpush.msra.mxu0 %v61
    %116 = vmatpush.msra.mxu0 %v57
    %117 = vmatpush.msra.mxu0 %v53
    %118 = vmatmul.f32.gmra.mxu0 %v80
    %v119 = vpop.f32.mrf.mxu0
    %v120 = vadd.f32 %v71, %v119
    %121 = vdwg.mxu0
    %122 = vmatpush.msra.mxu0 0.0
    %123 = vmatpush.msra.mxu0 0.0
    %124 = vmatpush.msra.mxu0 0.0
    %125 = vmatpush.msra.mxu0 0.0
    %126 = vmatpush.msra.mxu0 0.0
    %127 = vmatpush.msra.mxu0 0.0
    %128 = vmatpush.msra.mxu0 0.0
    %129 = vmatpush.msra.mxu0 0.0
    %130 = vmatpush.msra.mxu0 0.0
    %131 = vmatpush.msra.mxu0 0.0
    %132 = vmatpush.msra.mxu0 0.0
    %133 = vmatpush.msra.mxu0 0.0
    %134 = vmatpush.msra.mxu0 %v66
    %135 = vmatpush.msra.mxu0 %v62
    %136 = vmatpush.msra.mxu0 %v58
    %137 = vmatpush.msra.mxu0 %v54
    %138 = vmatmul.f32.gmra.mxu0 %v80
    %v139 = vpop.f32.mrf.mxu0
    %v140 = vadd.f32 %v72, %v139
    %141 = vdwg.mxu0
    %142 = vmatpush.msra.mxu0 0.0
    %143 = vmatpush.msra.mxu0 0.0
    %144 = vmatpush.msra.mxu0 0.0
    %145 = vmatpush.msra.mxu0 0.0
    %146 = vmatpush.msra.mxu0 0.0
    %147 = vmatpush.msra.mxu0 0.0
    %148 = vmatpush.msra.mxu0 0.0
    %149 = vmatpush.msra.mxu0 0.0
    %150 = vmatpush.msra.mxu0 0.0
    %151 = vmatpush.msra.mxu0 0.0
    %152 = vmatpush.msra.mxu0 0.0
    %153 = vmatpush.msra.mxu0 0.0
    %154 = vmatpush.msra.mxu0 %v67
    %155 = vmatpush.msra.mxu0 %v63
    %156 = vmatpush.msra.mxu0 %v59
    %157 = vmatpush.msra.mxu0 %v55
    %158 = vmatmul.f32.gmra.mxu0 %v80
    %v159 = vpop.f32.mrf.mxu0
    %v160 = vadd.f32 %v73, %v159
    %161 = vdwg.mxu0
    %162 = vst [vmem:[#allocation8] sm:$0xff] %v140
    %163 = vst [vmem:[#allocation8 + $0x8] sm:$0xff] %v160
    %v164 = vmax.f32 %v100, %v120
    %165 = vmax.xlane.f32.xlu0 %v164
    %v166 = vpop.xlane.xlu0 %165
    %v167 = vsub.f32 %v100, %v166
    %v168 = vsub.f32 %v120, %v166
    %v169 = vmul.f32 %v167, 1.442695
    %v170 = vpow.pop %v169
    %v171 = vmul.f32 %v168, 1.442695
    %v172 = vpow.pop %v171
    %v173 = vadd.f32 %v170, %v172
    %174 = vadd.xlane.f32.xlu0 %v173
    %v175 = vpop.xlane.xlu0 %174
    %v176 = vld [vmem:[%s1] sm:$0xff]
    %v177 = vmul.f32 %v176, 1.442695
    %v178 = vpow.pop %v177
    %v179 = vrcp.pop %v175
    %v180 = vmul.f32 %v178, %v179
    %182 = vset.pattern.permute.xlu0 0
    %183 = vperm.xlu0 %182, %v180
    %v184 = vpop.permute.xlu0 %183
    %v186 = vmul.f32 %v170, %v184
    %v187 = vmul.f32 %v172, %v184
    %188 = vst [vmem:[#allocation7] sm:$0xff] %v186
    %189 = vst [vmem:[#allocation7 + $0x8] sm:$0xff] %v187
    // Predicated region
    $region26: #{tpu_custom_call.1} parent=1 // pred_check
      _
    $region27: #{tpu_custom_call.1} parent=1 // pred_check_branch
      %191 = sbr.rel (0) target = $region29
    $region28: #{tpu_custom_call.1} parent=1 // pred_region
      %193 = vsyncadd [#allocation4], 0
      %s195 = sshll.u32 [#allocation7], 4
      %s196 = int_to_ptr.vmem [resolvable:$true] %s195
      %s197 = sshll.u32 %s4, 4
      %s198 = int_to_ptr.hbm [resolvable:$true] %s197
      %200 = dma.vmem_to_hbm [thread:$0]  %s196, 256, %s198, [#allocation4]
    $region29: #{tpu_custom_call.1} parent=1 // pred_fallthru
      _
    // Predicated region
    $region30: #{tpu_custom_call.1} parent=1 // pred_check
      _
    $region31: #{tpu_custom_call.1} parent=1 // pred_check_branch
      %202 = sbr.rel (0) target = $region33
    $region32: #{tpu_custom_call.1} parent=1 // pred_region
      %204 = vsyncadd [#allocation9], 0
      %s206 = sshll.u32 [#allocation8], 4
      %s207 = int_to_ptr.vmem [resolvable:$true] %s206
      %s208 = sshll.u32 %s5, 4
      %s209 = int_to_ptr.hbm [resolvable:$true] %s208
      %211 = dma.vmem_to_hbm [thread:$0]  %s207, 256, %s209, [#allocation9]
    $region33: #{tpu_custom_call.1} parent=1 // pred_fallthru
      _
    // Predicated region
    $region34: #{tpu_custom_call.1} parent=1 // pred_check
      _
    $region35: #{tpu_custom_call.1} parent=1 // pred_check_branch
      %213 = sbr.rel (0) target = $region37
    $region36: #{tpu_custom_call.1} parent=1 // pred_region
      %215 = dma.done [#allocation4], 256
    $region37: #{tpu_custom_call.1} parent=1 // pred_fallthru
      _
    // Predicated region
    $region38: #{tpu_custom_call.1} parent=1 // pred_check
      _
    $region39: #{tpu_custom_call.1} parent=1 // pred_check_branch
      %217 = sbr.rel (0) target = $region41
    $region40: #{tpu_custom_call.1} parent=1 // pred_region
      %219 = dma.done [#allocation9], 256
    $region41: #{tpu_custom_call.1} parent=1 // pred_fallthru
      _
    %220 = vsyncpa [#allocation3], 1
    %221 = vsyncpa [#allocation6], 1
    %222 = vsyncpa [#allocation4], 1
    %223 = vsyncpa [#allocation9], 1

// kernel: tpu_custom_call.1
$region0: #{tpu_custom_call.1}
  #allocation0 [shape = 'u32[]', space=smem, size = 0x4, offset = 0x4, fixed_abs, tag = 'smem constant byte address 0x4 - core index']
  #allocation1 [shape = 'u32[72,128]{1,0:T(1,128)}', space=vmem, size = 0x9000, scoped, tag = 'internal scratch']
  %s0 = inlined_call_operand.vmem [shape: f32[8,32], index: 0, kind: input, shape index: {}]
  %s1 = inlined_call_operand.vmem [shape: f32[8,1], index: 1, kind: input, shape index: {}]
  %s2 = inlined_call_operand.hbm [shape: f32[32,512], index: 2, kind: input, shape index: {}]
  %s3 = inlined_call_operand.hbm [shape: f32[1,512], index: 3, kind: input, shape index: {}]
  %s4 = inlined_call_operand.hbm [shape: f32[8,256], index: 4, kind: output, shape index: {0}]
  %s5 = inlined_call_operand.hbm [shape: f32[8,256], index: 5, kind: output, shape index: {1}]
  %6 = xla_tuple %s4, %s5
  %s7 = sld [smem:[#allocation0]]
  $region42: #{tpu_custom_call.1} parent=0
    _
  %s9 = ssub.s32 1, %s7
  %s10 = scalar_select 0, %s9, %s7
  $region1: #{tpu_custom_call.1} parent=0
    #allocation2 [shape = 'u8[65536]{0}', space=vmem, size = 0x10000, scoped, tag = 'input window, operand 2, single buffered']
    #allocation3 [shape = 's32[1]{0}', space=sflag, size = 0x4, scoped, tag = 'scoped memory for tpu_custom_call.1']
    #allocation4 [shape = 's32[1]{0}', space=sflag, size = 0x4, scoped, tag = 'scoped memory for tpu_custom_call.1']
    #allocation5 [shape = 'u8[2048]{0}', space=vmem, size = 0x800, scoped, tag = 'input window, operand 3, single buffered']
    #allocation6 [shape = 's32[1]{0}', space=sflag, size = 0x4, scoped, tag = 'scoped memory for tpu_custom_call.1']
    #allocation7 [shape = 'u8[8192]{0}', space=vmem, size = 0x2000, scoped, tag = 'output window, operand 0, single buffered']
    #allocation8 [shape = 'u8[8192]{0}', space=vmem, size = 0x2000, scoped, tag = 'output window, operand 1, single buffered']
    #allocation9 [shape = 's32[1]{0}', space=sflag, size = 0x4, scoped, tag = 'scoped memory for tpu_custom_call.1']
    %11 = vsyncpa [#allocation3], 0
    %12 = vsyncpa [#allocation6], 0
    %13 = vsyncpa [#allocation4], 0
    %14 = vsyncpa [#allocation9], 0
    // Predicated region
    $region2: #{tpu_custom_call.1} parent=1 // pred_check
      _
    $region3: #{tpu_custom_call.1} parent=1 // pred_check_branch
      %16 = sbr.rel (0) target = $region5
    $region4: #{tpu_custom_call.1} parent=1 // pred_region
      _
    $region5: #{tpu_custom_call.1} parent=1 // pred_fallthru
      _
    // Predicated region
    $region6: #{tpu_custom_call.1} parent=1 // pred_check
      _
    $region7: #{tpu_custom_call.1} parent=1 // pred_check_branch
      %18 = sbr.rel (0) target = $region9
    $region8: #{tpu_custom_call.1} parent=1 // pred_region
      _
    $region9: #{tpu_custom_call.1} parent=1 // pred_fallthru
      _
    // Predicated region
    $region10: #{tpu_custom_call.1} parent=1 // pred_check
      _
    $region11: #{tpu_custom_call.1} parent=1 // pred_check_branch
      %20 = sbr.rel (0) target = $region13
    $region12: #{tpu_custom_call.1} parent=1 // pred_region
      %22 = vsyncadd [#allocation3], 0
      %s23 = sshll.u32 %s2, 4
      %s24 = int_to_ptr.hbm [resolvable:$true] %s23
      %s25 = sshll.u32 [#allocation2], 4
      %s26 = int_to_ptr.vmem [resolvable:$true] %s25
      %31 = dma.hbm_to_vmem [thread:$0]  %s24, 2048, %s26, [#allocation3], 512, 512, 32
    $region13: #{tpu_custom_call.1} parent=1 // pred_fallthru
      _
    // Predicated region
    $region14: #{tpu_custom_call.1} parent=1 // pred_check
      _
    $region15: #{tpu_custom_call.1} parent=1 // pred_check_branch
      %33 = sbr.rel (0) target = $region17
    $region16: #{tpu_custom_call.1} parent=1 // pred_region
      %35 = vsyncadd [#allocation6], 0
      %s37 = sshll.u32 %s3, 4
      %s38 = int_to_ptr.hbm [resolvable:$true] %s37
      %s39 = sshll.u32 [#allocation5], 4
      %s40 = int_to_ptr.vmem [resolvable:$true] %s39
      %42 = dma.hbm_to_vmem [thread:$0]  %s38, 64, %s40, [#allocation6]
    $region17: #{tpu_custom_call.1} parent=1 // pred_fallthru
      _
    // Predicated region
    $region18: #{tpu_custom_call.1} parent=1 // pred_check
      _
    $region19: #{tpu_custom_call.1} parent=1 // pred_check_branch
      %44 = sbr.rel (0) target = $region21
    $region20: #{tpu_custom_call.1} parent=1 // pred_region
      %46 = dma.done [#allocation3], 2048
    $region21: #{tpu_custom_call.1} parent=1 // pred_fallthru
      _
    // Predicated region
    $region22: #{tpu_custom_call.1} parent=1 // pred_check
      _
    $region23: #{tpu_custom_call.1} parent=1 // pred_check_branch
      %48 = sbr.rel (0) target = $region25
    $region24: #{tpu_custom_call.1} parent=1 // pred_region
      %50 = dma.done [#allocation6], 64
    $region25: #{tpu_custom_call.1} parent=1 // pred_fallthru
      _
    %v51 = vld [vmem:[%s0] sm:$0xff]
    %v52 = vld [vmem:[#allocation2] sm:$0xff]
    %v53 = vld [vmem:[#allocation2 + $0x8] sm:$0xff]
    %v54 = vld [vmem:[#allocation2 + $0x10] sm:$0xff]
    %v55 = vld [vmem:[#allocation2 + $0x18] sm:$0xff]
    %v56 = vld [vmem:[#allocation2 + $0x20] sm:$0xff]
    %v57 = vld [vmem:[#allocation2 + $0x28] sm:$0xff]
    %v58 = vld [vmem:[#allocation2 + $0x30] sm:$0xff]
    %v59 = vld [vmem:[#allocation2 + $0x38] sm:$0xff]
    %v60 = vld [vmem:[#allocation2 + $0x40] sm:$0xff]
    %v61 = vld [vmem:[#allocation2 + $0x48] sm:$0xff]
    %v62 = vld [vmem:[#allocation2 + $0x50] sm:$0xff]
    %v63 = vld [vmem:[#allocation2 + $0x58] sm:$0xff]
    %v64 = vld [vmem:[#allocation2 + $0x60] sm:$0xff]
    %v65 = vld [vmem:[#allocation2 + $0x68] sm:$0xff]
    %v66 = vld [vmem:[#allocation2 + $0x70] sm:$0xff]
    %v67 = vld [vmem:[#allocation2 + $0x78] sm:$0xff]
    %v68 = vld [vmem:[#allocation5] sm:$0xf]
    %v70 = vperm.slane %v68, 0
    %v71 = vperm.slane %v68, 1
    %v72 = vperm.slane %v68, 2
    %v73 = vperm.slane %v68, 3
    %vm78 = vcmask 261120
    %v80 = vsel %vm78, %v51, 0
    %82 = vmatpush.msra.mxu0 0.0
    %83 = vmatpush.msra.mxu0 0.0
    %84 = vmatpush.msra.mxu0 0.0
    %85 = vmatpush.msra.mxu0 0.0
    %86 = vmatpush.msra.mxu0 0.0
    %87 = vmatpush.msra.mxu0 0.0
    %88 = vmatpush.msra.mxu0 0.0
    %89 = vmatpush.msra.mxu0 0.0
    %90 = vmatpush.msra.mxu0 0.0
    %91 = vmatpush.msra.mxu0 0.0
    %92 = vmatpush.msra.mxu0 0.0
    %93 = vmatpush.msra.mxu0 0.0
    %94 = vmatpush.msra.mxu0 %v64
    %95 = vmatpush.msra.mxu0 %v60
    %96 = vmatpush.msra.mxu0 %v56
    %97 = vmatpush.msra.mxu0 %v52
    %98 = vmatmul.f32.gmra.mxu0 %v80
    %v99 = vpop.f32.mrf.mxu0
    %v100 = vadd.f32 %v70, %v99
    %101 = vdwg.mxu0
    %102 = vmatpush.msra.mxu0 0.0
    %103 = vmatpush.msra.mxu0 0.0
    %104 = vmatpush.msra.mxu0 0.0
    %105 = vmatpush.msra.mxu0 0.0
    %106 = vmatpush.msra.mxu0 0.0
    %107 = vmatpush.msra.mxu0 0.0
    %108 = vmatpush.msra.mxu0 0.0
    %109 = vmatpush.msra.mxu0 0.0
    %110 = vmatpush.msra.mxu0 0.0
    %111 = vmatpush.msra.mxu0 0.0
    %112 = vmatpush.msra.mxu0 0.0
    %113 = vmatpush.msra.mxu0 0.0
    %114 = vmatpush.msra.mxu0 %v65
    %115 = vmatpush.msra.mxu0 %v61
    %116 = vmatpush.msra.mxu0 %v57
    %117 = vmatpush.msra.mxu0 %v53
    %118 = vmatmul.f32.gmra.mxu0 %v80
    %v119 = vpop.f32.mrf.mxu0
    %v120 = vadd.f32 %v71, %v119
    %121 = vdwg.mxu0
    %122 = vmatpush.msra.mxu0 0.0
    %123 = vmatpush.msra.mxu0 0.0
    %124 = vmatpush.msra.mxu0 0.0
    %125 = vmatpush.msra.mxu0 0.0
    %126 = vmatpush.msra.mxu0 0.0
    %127 = vmatpush.msra.mxu0 0.0
    %128 = vmatpush.msra.mxu0 0.0
    %129 = vmatpush.msra.mxu0 0.0
    %130 = vmatpush.msra.mxu0 0.0
    %131 = vmatpush.msra.mxu0 0.0
    %132 = vmatpush.msra.mxu0 0.0
    %133 = vmatpush.msra.mxu0 0.0
    %134 = vmatpush.msra.mxu0 %v66
    %135 = vmatpush.msra.mxu0 %v62
    %136 = vmatpush.msra.mxu0 %v58
    %137 = vmatpush.msra.mxu0 %v54
    %138 = vmatmul.f32.gmra.mxu0 %v80
    %v139 = vpop.f32.mrf.mxu0
    %v140 = vadd.f32 %v72, %v139
    %141 = vdwg.mxu0
    %142 = vmatpush.msra.mxu0 0.0
    %143 = vmatpush.msra.mxu0 0.0
    %144 = vmatpush.msra.mxu0 0.0
    %145 = vmatpush.msra.mxu0 0.0
    %146 = vmatpush.msra.mxu0 0.0
    %147 = vmatpush.msra.mxu0 0.0
    %148 = vmatpush.msra.mxu0 0.0
    %149 = vmatpush.msra.mxu0 0.0
    %150 = vmatpush.msra.mxu0 0.0
    %151 = vmatpush.msra.mxu0 0.0
    %152 = vmatpush.msra.mxu0 0.0
    %153 = vmatpush.msra.mxu0 0.0
    %154 = vmatpush.msra.mxu0 %v67
    %155 = vmatpush.msra.mxu0 %v63
    %156 = vmatpush.msra.mxu0 %v59
    %157 = vmatpush.msra.mxu0 %v55
    %158 = vmatmul.f32.gmra.mxu0 %v80
    %v159 = vpop.f32.mrf.mxu0
    %v160 = vadd.f32 %v73, %v159
    %161 = vdwg.mxu0
    %162 = vst [vmem:[#allocation8] sm:$0xff] %v140
    %163 = vst [vmem:[#allocation8 + $0x8] sm:$0xff] %v160
    %v164 = vmax.f32 %v100, %v120
    %165 = vmax.xlane.f32.xlu0 %v164
    %v166 = vpop.xlane.xlu0 %165
    %v167 = vsub.f32 %v100, %v166
    %v168 = vsub.f32 %v120, %v166
    %v169 = vmul.f32 %v167, 1.442695
    %v170 = vpow.pop %v169
    %v171 = vmul.f32 %v168, 1.442695
    %v172 = vpow.pop %v171
    %v173 = vadd.f32 %v170, %v172
    %174 = vadd.xlane.f32.xlu0 %v173
    %v175 = vpop.xlane.xlu0 %174
    %v176 = vld [vmem:[%s1] sm:$0xff]
    %v177 = vmul.f32 %v176, 1.442695
    %v178 = vpow.pop %v177
    %v179 = vrcp.pop %v175
    %v180 = vmul.f32 %v178, %v179
    %182 = vset.pattern.permute.xlu0 0
    %183 = vperm.xlu0 %182, %v180
    %v184 = vpop.permute.xlu0 %183
    %v186 = vmul.f32 %v170, %v184
    %v187 = vmul.f32 %v172, %v184
    %188 = vst [vmem:[#allocation7] sm:$0xff] %v186
    %189 = vst [vmem:[#allocation7 + $0x8] sm:$0xff] %v187
    // Predicated region
    $region26: #{tpu_custom_call.1} parent=1 // pred_check
      _
    $region27: #{tpu_custom_call.1} parent=1 // pred_check_branch
      %191 = sbr.rel (0) target = $region29
    $region28: #{tpu_custom_call.1} parent=1 // pred_region
      %193 = vsyncadd [#allocation4], 0
      %s195 = sshll.u32 [#allocation7], 4
      %s196 = int_to_ptr.vmem [resolvable:$true] %s195
      %s197 = sshll.u32 %s4, 4
      %s198 = int_to_ptr.hbm [resolvable:$true] %s197
      %200 = dma.vmem_to_hbm [thread:$0]  %s196, 256, %s198, [#allocation4]
    $region29: #{tpu_custom_call.1} parent=1 // pred_fallthru
      _
    // Predicated region
    $region30: #{tpu_custom_call.1} parent=1 // pred_check
      _
    $region31: #{tpu_custom_call.1} parent=1 // pred_check_branch
      %202 = sbr.rel (0) target = $region33
    $region32: #{tpu_custom_call.1} parent=1 // pred_region
      %204 = vsyncadd [#allocation9], 0
      %s206 = sshll.u32 [#allocation8], 4
      %s207 = int_to_ptr.vmem [resolvable:$true] %s206
      %s208 = sshll.u32 %s5, 4
      %s209 = int_to_ptr.hbm [resolvable:$true] %s208
      %211 = dma.vmem_to_hbm [thread:$0]  %s207, 256, %s209, [#allocation9]
    $region33: #{tpu_custom_call.1} parent=1 // pred_fallthru
      _
    // Predicated region
    $region34: #{tpu_custom_call.1} parent=1 // pred_check
      _
    $region35: #{tpu_custom_call.1} parent=1 // pred_check_branch
      %213 = sbr.rel (0) target = $region37
    $region36: #{tpu_custom_call.1} parent=1 // pred_region
      %215 = dma.done [#allocation4], 256
    $region37: #{tpu_custom_call.1} parent=1 // pred_fallthru
      _
    // Predicated region
    $region38: #{tpu_custom_call.1} parent=1 // pred_check
      _
    $region39: #{tpu_custom_call.1} parent=1 // pred_check_branch
      %217 = sbr.rel (0) target = $region41
    $region40: #{tpu_custom_call.1} parent=1 // pred_region
      %219 = dma.done [#allocation9], 256
    $region41: #{tpu_custom_call.1} parent=1 // pred_fallthru
      _
    %220 = vsyncpa [#allocation3], 1
    %221 = vsyncpa [#allocation6], 1
    %222 = vsyncpa [#allocation4], 1
    %223 = vsyncpa [#allocation9], 1

</llo_original>
